<compile_context>
chip_gen: v7x
topology: tpu7x:2x2x1
jax: 0.10.0
libtpu: 0.0.40
codegen_flags: <defaults>
</compile_context>

<pallas_src>
import functools

import jax
import jax.numpy as jnp
from jax.experimental import pallas as pl
from jax.experimental.pallas import tpu as pltpu


def _gram_kernel(w_ref, g_ref):
    """Accumulate the fused Gram G += W^T W over the frame (reduction) axis."""
    i = pl.program_id(1)  # reduction-axis step (per core)

    @pl.when(i == 0)
    def _():
        g_ref[...] = jnp.zeros_like(g_ref)

    w = w_ref[...]  # (frame_tile, D+C), dtype as supplied (f32 or bf16)
    # Contract the frame axis directly (W^T W) without materializing W^T.
    g_ref[...] += jax.lax.dot_general(
        w, w,
        dimension_numbers=(((0,), (0,)), ((), ())),
        preferred_element_type=jnp.float32,
    )


def _finalize_kernel(g_ref, out_ref, *, d, num_frames):
    """Sum per-core partial Grams and reduce to the scalar DC loss."""
    g = jnp.sum(g_ref[...], axis=0)  # (D+C, D+C) full Gram of W = [V | Y]
    dc = g.shape[0]
    rows = jax.lax.broadcasted_iota(jnp.int32, (dc, dc), 0)
    cols = jax.lax.broadcasted_iota(jnp.int32, (dc, dc), 1)
    # +1 on the V/V and Y/Y diagonal blocks, -1 on the two V/Y blocks:
    #   sum(sign * G * G) = ||V^T V||^2 - 2 ||V^T Y||^2 + ||Y^T Y||^2
    sign = jnp.where((rows < d) == (cols < d), 1.0, -1.0).astype(jnp.float32)
    n = jnp.float32(num_frames)
    out_ref[0, 0] = jnp.sum(sign * g * g) / (n * n)


def deep_clustering_loss(output, target, num_classes, *, frame_tile=1024,
                         num_cores=2, compute_dtype=None):
    """output: (N, D) float embeddings, target: (N,) int labels. Scalar loss."""
    N, D = output.shape
    C = num_classes
    DC = D + C

    assert frame_tile % 256 == 0, "frame_tile must be a multiple of 256"

    # One-hot in the wrapper (matches torch's nn.functional.one_hot + .float()),
    # fuse V and Y into a single lane-contiguous stream W = [V | Y].
    y = jax.nn.one_hot(target, C, dtype=output.dtype)
    w = jnp.concatenate([output, y], axis=1)  # (N, D+C)
    if compute_dtype is not None:
        w = w.astype(compute_dtype)           # e.g. bf16: halves HBM traffic

    # Shrink the tile for small inputs, keep it a multiple of 256 (MXU-aligned).
    per_core = -(-N // num_cores)
    ft = min(frame_tile, -(-per_core // 256) * 256)

    # Zero-pad the frame axis: zero rows contribute 0 to every Gram entry.
    padded_n = num_cores * ft * (-(-N // (num_cores * ft)))
    if padded_n != N:
        w = jnp.pad(w, ((0, padded_n - N), (0, 0)))
    steps = padded_n // (num_cores * ft)

    # Stage 1: per-core partial Grams, frame reduction split across cores.
    partial_grams = pl.pallas_call(
        _gram_kernel,
        out_shape=jax.ShapeDtypeStruct((num_cores, DC, DC), jnp.float32),
        grid_spec=pltpu.PrefetchScalarGridSpec(
            num_scalar_prefetch=0,
            grid=(num_cores, steps),
            in_specs=[
                pl.BlockSpec((ft, DC),
                             lambda p, i, steps=steps: (p * steps + i, 0)),
            ],
            out_specs=pl.BlockSpec((None, DC, DC), lambda p, i: (p, 0, 0)),
        ),
        compiler_params=pltpu.CompilerParams(
            dimension_semantics=("parallel", "arbitrary"),
        ),
    )(w)

    # Stage 2: tiny finalize -- combine partial Grams, sign-masked Frobenius
    # reduction, scalar result written to SMEM.
    finalize = functools.partial(_finalize_kernel, d=D, num_frames=N)
    out = pl.pallas_call(
        finalize,
        out_shape=jax.ShapeDtypeStruct((1, 1), jnp.float32),
        in_specs=[pl.BlockSpec(memory_space=pltpu.MemorySpace.VMEM)],
        out_specs=pl.BlockSpec(memory_space=pltpu.MemorySpace.SMEM),
    )(partial_grams)
    return out[0, 0]


if __name__ == "__main__":
    key = jax.random.PRNGKey(0)
    k_v, k_t = jax.random.split(key)

    N, D, C = 128, 32, 4  # frames, embedding dim, number of sources
    output = jax.random.normal(k_v, (N, D), dtype=jnp.float32)
    # Integer class labels; ensure every class 0..C-1 is present so torch's
    # inferred num_classes would also equal C.
    target = jax.random.randint(k_t, (N,), 0, C, dtype=jnp.int32)
    target = target.at[:C].set(jnp.arange(C, dtype=jnp.int32))

    loss = deep_clustering_loss(output, target, num_classes=C)
    loss = jax.block_until_ready(loss)

    # float64 numpy reference (exact up to f64) for the correctness check.
    import numpy as np
    v64 = np.asarray(output, dtype=np.float64)
    y64 = np.zeros((N, C), dtype=np.float64)
    y64[np.arange(N), np.asarray(target)] = 1.0
    vt_v = np.sum((v64.T @ v64) ** 2)
    vt_y = np.sum((v64.T @ y64) ** 2)
    yt_y = np.sum((y64.T @ y64) ** 2)
    ref = (vt_v - 2.0 * vt_y + yt_y) / (N ** 2)

    assert np.allclose(float(loss), ref, rtol=5e-3, atol=5e-3), (float(loss), ref)
    print("KERNEL_OK")
</pallas_src>

<mosaic_0001>
module attributes {stable_mosaic.version = 11 : i64} {
  func.func @_gram_kernel(%arg0: i32, %arg1: i32, %arg2: memref<256x36xf32, #tpu.memory_space<vmem>>, %arg3: memref<1x36x36xf32, #tpu.memory_space<vmem>>) attributes {dimension_semantics = [#tpu.dimension_semantics<parallel>, #tpu.dimension_semantics<arbitrary>], iteration_bounds = array<i64: 2, 1>, scalar_prefetch = 0 : i64, scratch_operands = 0 : i64, tpu.core_type = #tpu.core_type<tc>, window_params = [{transform_indices = @transform_0, window_bounds = array<i64: 256, 36>}, {transform_indices = @transform_1, window_bounds = array<i64: 1, 36, 36>}]} {
    %c0_i32 = arith.constant 0 : i32
    %0 = arith.cmpi eq, %arg1, %c0_i32 : i32
    %1 = arith.extui %0 : i1 to i32
    %c0_i32_0 = arith.constant 0 : i32
    %2 = arith.cmpi ne, %1, %c0_i32_0 : i32
    scf.if %2 {
      %cst_8 = arith.constant 0.000000e+00 : f32
      %11 = vector.broadcast %cst_8 : f32 to vector<36x36xf32>
      %c0_9 = arith.constant 0 : index
      %c0_10 = arith.constant 0 : index
      %c0_11 = arith.constant 0 : index
      %12 = vector.load %arg3[%c0_9, %c0_10, %c0_11] : memref<1x36x36xf32, #tpu.memory_space<vmem>>, vector<1x36x36xf32>
      %13 = vector.shape_cast %12 : vector<1x36x36xf32> to vector<36x36xf32>
      %14 = vector.shape_cast %11 : vector<36x36xf32> to vector<1x36x36xf32>
      tpu.vector_store %arg3[%c0_9, %c0_10, %c0_11], %14 {strides = array<i32>} : memref<1x36x36xf32, #tpu.memory_space<vmem>>, vector<1x36x36xf32>,
    } else {
    }
    %c0 = arith.constant 0 : index
    %c0_1 = arith.constant 0 : index
    %3 = vector.load %arg2[%c0, %c0_1] : memref<256x36xf32, #tpu.memory_space<vmem>>, vector<256x36xf32>
    %c0_2 = arith.constant 0 : index
    %c0_3 = arith.constant 0 : index
    %c0_4 = arith.constant 0 : index
    %4 = vector.load %arg3[%c0_2, %c0_3, %c0_4] : memref<1x36x36xf32, #tpu.memory_space<vmem>>, vector<1x36x36xf32>
    %5 = vector.shape_cast %4 : vector<1x36x36xf32> to vector<36x36xf32>
    %cst = arith.constant dense<0.000000e+00> : vector<36x36xf32>
    %6 = tpu.matmul %3, %3, %cst {dimension_numbers = #tpu.dot_dimension_numbers<[0], [0], [1], [1], [0, 1, 1, 1], [], []>} : vector<256x36xf32>, vector<256x36xf32>, vector<36x36xf32> -> vector<36x36xf32>
    %7 = arith.addf %5, %6 : vector<36x36xf32>
    %c0_5 = arith.constant 0 : index
    %c0_6 = arith.constant 0 : index
    %c0_7 = arith.constant 0 : index
    %8 = vector.load %arg3[%c0_5, %c0_6, %c0_7] : memref<1x36x36xf32, #tpu.memory_space<vmem>>, vector<1x36x36xf32>
    %9 = vector.shape_cast %8 : vector<1x36x36xf32> to vector<36x36xf32>
    %10 = vector.shape_cast %7 : vector<36x36xf32> to vector<1x36x36xf32>
    tpu.vector_store %arg3[%c0_5, %c0_6, %c0_7], %10 {strides = array<i32>} : memref<1x36x36xf32, #tpu.memory_space<vmem>>, vector<1x36x36xf32>,
    return
  }
  func.func @transform_0(%arg0: i32, %arg1: i32) -> (i32, i32) {
    %c1_i32 = arith.constant 1 : i32
    %0 = arith.muli %arg0, %c1_i32 : i32
    %1 = arith.addi %0, %arg1 : i32
    %c0_i32 = arith.constant 0 : i32
    %c0_i32_0 = arith.constant 0 : i32
    return %1, %c0_i32 : i32, i32
  }
  func.func @transform_1(%arg0: i32, %arg1: i32) -> (i32, i32, i32) {
    %c0_i32 = arith.constant 0 : i32
    %c0_i32_0 = arith.constant 0 : i32
    %c0_i32_1 = arith.constant 0 : i32
    return %arg0, %c0_i32, %c0_i32_0 : i32, i32, i32
  }
}

</mosaic_0001>

<llo_original>
// kernel: tpu_custom_call.1
$region0: #{tpu_custom_call.1}
  #allocation0 [shape = 'u32[]', space=smem, size = 0x4, offset = 0x4, fixed_abs, tag = 'smem constant byte address 0x4 - core index']
  #allocation1 [shape = 'u32[144,128]{1,0:T(1,128)}', space=vmem, size = 0x12000, scoped, tag = 'internal scratch']
  %s0 = inlined_call_operand.vmem [shape: f32[512,36], index: 0, kind: input, shape index: {}]
  %s1 = inlined_call_operand.vmem [shape: f32[2,36,36], index: 1, kind: output, shape index: {}]
  %s2 = sld [smem:[#allocation0]]
  $region41: #{tpu_custom_call.1} parent=0
    _
  %s4 = ssub.s32 1, %s2
  %s5 = scalar_select 0, %s4, %s2
  loop: start=0, step=1, limit=4
  $region2: #{tpu_custom_call.1} parent=0 // loop_pre_header
    _
  $region3: #{tpu_custom_call.1} parent=0 // loop_header
    %s7 = sphi 0, %s11
    %p8 = scmp.ge.s32.totalorder %s7, 4
    %s14 = sphi 0, %s26
    %s15 = sphi 0, %s22
    %s16 = sphi 0, %s14
    %s17 = sphi 0, %s15
    %s18 = sphi 0, %s16
    %s19 = sphi 0, %s17
    %s31 = sphi 0, %s33
    %s34 = sphi 0, %s31
    %s35 = sphi 0, %s34
    %s51 = sphi 0, %s35
    %s57 = sphi 0, %s59
    %s60 = sphi 0, %s57
    %s61 = sphi 0, %s60
    %s77 = sphi 0, %s61
  $region4: #{tpu_custom_call.1} parent=0 // loop_header_branch
    %10 = sbr.rel (%p8) target = $region8
  $region5: #{tpu_custom_call.1} parent=0 // loop_body
    %s12 = ssub.s32 %s7, 1
    %s13 = ssub.s32 %s7, 2
    %s20 = sadd.s32 1, %s15
    %p21 = scmp.ge.s32.totalorder %s20, 1
    %s22 = scalar_select %p21, 0, %s20
    %s23 = sadd.s32 1, %s14
    %s24 = scalar_select %p21, %s23, %s14
    %p25 = scmp.ge.s32.totalorder %s24, 2
    %s26 = scalar_select %p25, 0, %s24
    %s27 = sadd.s32 %s14, %s15
    %s28 = sadd.s32 %s26, %s22
    %s29 = ssub.s32 %s27, %s28
    %p30 = scmp.eq.s32.totalorder %s29, 0
    %s32 = sadd.s32 %s31, 1
    %s33 = scalar_select %p30, %s31, %s32
    %p36 = pneg %p30
    %p37 = scmp.eq.s32.totalorder %s7, 1
    %p38 = por %p36, %p37
    %p39 = scmp.ne.s32.totalorder %s31, %s34
    %p40 = scmp.eq.s32.totalorder %s7, 0
    %p41 = por %p39, %p40
    %p42 = scmp.ne.s32.totalorder %s31, %s34
    %p43 = scmp.eq.s32.totalorder %s12, 1
    %p44 = por %p42, %p43
    %p45 = scmp.ne.s32.totalorder %s34, %s35
    %p46 = scmp.eq.s32.totalorder %s12, 0
    %p47 = por %p45, %p46
    %p48 = scmp.ne.s32.totalorder %s34, %s35
    %p49 = scmp.eq.s32.totalorder %s13, 1
    %p50 = por %p48, %p49
    %p52 = scmp.ne.s32.totalorder %s35, %s51
    %p53 = scmp.eq.s32.totalorder %s13, 0
    %p54 = por %p52, %p53
    %s55 = ssub.s32 %s14, %s26
    %p56 = scmp.eq.s32.totalorder %s55, 0
    %s58 = sadd.s32 %s57, 1
    %s59 = scalar_select %p56, %s57, %s58
    %p62 = pneg %p56
    %p63 = scmp.eq.s32.totalorder %s7, 1
    %p64 = por %p62, %p63
    %p65 = scmp.ne.s32.totalorder %s57, %s60
    %p66 = scmp.eq.s32.totalorder %s7, 0
    %p67 = por %p65, %p66
    %p68 = scmp.ne.s32.totalorder %s57, %s60
    %p69 = scmp.eq.s32.totalorder %s12, 1
    %p70 = por %p68, %p69
    %p71 = scmp.ne.s32.totalorder %s60, %s61
    %p72 = scmp.eq.s32.totalorder %s12, 0
    %p73 = por %p71, %p72
    %p74 = scmp.ne.s32.totalorder %s60, %s61
    %p75 = scmp.eq.s32.totalorder %s13, 1
    %p76 = por %p74, %p75
    %p78 = scmp.ne.s32.totalorder %s61, %s77
    %p79 = scmp.eq.s32.totalorder %s13, 0
    %p80 = por %p78, %p79
    %p81 = scmp.le.s32.totalorder 1, %s7
    %p82 = scmp.lt.s32.totalorder %s7, 3
    %p83 = pnand %p81, %p82
    %p84 = pneg %p83
    // Predicated region
    $region9: #{tpu_custom_call.1} parent=5 // pred_check
      _
    $region10: #{tpu_custom_call.1} parent=5 // pred_check_branch
      %86 = sbr.rel (%p83) target = $region12
    $region11: #{tpu_custom_call.1} parent=5 // pred_region
      %s87 = ssub.s32 %s7, 1
    $region12: #{tpu_custom_call.1} parent=5 // pred_fallthru
      _
    %p88 = scmp.lt.s32.totalorder %s7, 2
    // Predicated region
    $region13: #{tpu_custom_call.1} parent=5 // pred_check
      %p89 = pneg %p88
    $region14: #{tpu_custom_call.1} parent=5 // pred_check_branch
      %91 = sbr.rel (%p89) target = $region16
    $region15: #{tpu_custom_call.1} parent=5 // pred_region
      // Predicated region
      $region17: #{tpu_custom_call.1} parent=15 // pred_check
        %p92 = pneg %p41
      $region18: #{tpu_custom_call.1} parent=15 // pred_check_branch
        %94 = sbr.rel (%p92) target = $region20
      $region19: #{tpu_custom_call.1} parent=15 // pred_region
        %s95 = sadd.s32 %s14, %s15
        %s96 = smul.u32 32, %s95
        %p97 = scmp.lt.s32.totalorder %s96, 63
        %s98 = scalar_select %p97, %s96, 63
        %s99 = smul.addr %s98, 8
        %s100 = scalar_lea.vmem %s0, %s99
        %s101 = sadd.s32 %s14, %s15
        %s102 = smul.u32 32, %s101
      $region20: #{tpu_custom_call.1} parent=15 // pred_fallthru
        _
    $region16: #{tpu_custom_call.1} parent=5 // pred_fallthru
      _
    %p103 = scmp.le.s32.totalorder 1, %s7
    %p104 = scmp.lt.s32.totalorder %s7, 3
    %p105 = pnand %p103, %p104
    %p106 = pneg %p105
    // Predicated region
    $region21: #{tpu_custom_call.1} parent=5 // pred_check
      _
    $region22: #{tpu_custom_call.1} parent=5 // pred_check_branch
      %108 = sbr.rel (%p105) target = $region24
    $region23: #{tpu_custom_call.1} parent=5 // pred_region
      %s109 = ssub.s32 %s7, 1
      %s110 = sadd.s32 %s16, %s17
      %s111 = smul.u32 32, %s110
      %p112 = scmp.lt.s32.totalorder %s111, 63
      %s113 = scalar_select %p112, %s111, 63
      %s114 = smul.addr %s113, 8
      %s115 = scalar_lea.vmem %s0, %s114
      %p116 = pneg %p47
      %p117 = pneg %p44
      %p118 = pneg %p73
      %p119 = pneg %p70
      %p120 = scmp.lt.s32.totalorder %s16, 1
      %s121 = scalar_select %p120, %s16, 1
      %s122 = smul.addr %s121, 5
      %s123 = smul.addr %s122, 8
      %s124 = scalar_lea.vmem %s1, %s123
      %s125 = sadd.s32 %s16, %s17
      %s126 = smul.u32 32, %s125
      %p127 = scmp.lt.s32.totalorder %s126, 63
      %s128 = scalar_select %p127, %s126, 63
      %s129 = smul.addr %s128, 8
      %s130 = scalar_lea.vmem %s0, %s129
      %s131 = sadd.s32 %s16, %s17
      %s132 = smul.u32 32, %s131
      %p133 = scmp.lt.s32.totalorder %s16, 1
      %s134 = scalar_select %p133, %s16, 1
      %s135 = smul.addr %s134, 5
      %s136 = smul.addr %s135, 8
      %s137 = scalar_lea.vmem %s1, %s136
      %p138 = scmp.eq.s32.totalorder %s17, 0
      // Predicated region
      $region25: #{tpu_custom_call.1} parent=23 // pred_check
        %p139 = pneg %p138
      $region26: #{tpu_custom_call.1} parent=23 // pred_check_branch
        %141 = sbr.rel (%p139) target = $region28
      $region27: #{tpu_custom_call.1} parent=23 // pred_region
        %vm142 = vcmask 293888
        %143 = vst.msk [vmem:[%s137] sm:$0xff] %vm142, 0.0
        %144 = vst.msk [vmem:[%s137 + $0x8] sm:$0xff] %vm142, 0.0
        %145 = vst.msk [vmem:[%s137 + $0x10] sm:$0xff] %vm142, 0.0
        %146 = vst.msk [vmem:[%s137 + $0x18] sm:$0xff] %vm142, 0.0
        %vm147 = vcmask 289792
        %148 = vst.msk [vmem:[%s137 + $0x20] sm:$0xf] %vm147, 0.0
      $region28: #{tpu_custom_call.1} parent=23 // pred_fallthru
        _
      %v149 = vld [vmem:[%s130] sm:$0xff]
      %v150 = vld [vmem:[%s130 + $0x8] sm:$0xff]
      %v151 = vld [vmem:[%s130 + $0x10] sm:$0xff]
      %v152 = vld [vmem:[%s130 + $0x18] sm:$0xff]
      %v153 = vld [vmem:[%s130 + $0x20] sm:$0xff]
      %v154 = vld [vmem:[%s130 + $0x28] sm:$0xff]
      %v155 = vld [vmem:[%s130 + $0x30] sm:$0xff]
      %v156 = vld [vmem:[%s130 + $0x38] sm:$0xff]
      %v157 = vld [vmem:[%s130 + $0x40] sm:$0xff]
      %v158 = vld [vmem:[%s130 + $0x48] sm:$0xff]
      %v159 = vld [vmem:[%s130 + $0x50] sm:$0xff]
      %v160 = vld [vmem:[%s130 + $0x58] sm:$0xff]
      %v161 = vld [vmem:[%s130 + $0x60] sm:$0xff]
      %v162 = vld [vmem:[%s130 + $0x68] sm:$0xff]
      %v163 = vld [vmem:[%s130 + $0x70] sm:$0xff]
      %v164 = vld [vmem:[%s130 + $0x78] sm:$0xff]
      %v165 = vld [vmem:[%s130 + $0x80] sm:$0xff]
      %v166 = vld [vmem:[%s130 + $0x88] sm:$0xff]
      %v167 = vld [vmem:[%s130 + $0x90] sm:$0xff]
      %v168 = vld [vmem:[%s130 + $0x98] sm:$0xff]
      %v169 = vld [vmem:[%s130 + $0xa0] sm:$0xff]
      %v170 = vld [vmem:[%s130 + $0xa8] sm:$0xff]
      %v171 = vld [vmem:[%s130 + $0xb0] sm:$0xff]
      %v172 = vld [vmem:[%s130 + $0xb8] sm:$0xff]
      %v173 = vld [vmem:[%s130 + $0xc0] sm:$0xff]
      %v174 = vld [vmem:[%s130 + $0xc8] sm:$0xff]
      %v175 = vld [vmem:[%s130 + $0xd0] sm:$0xff]
      %v176 = vld [vmem:[%s130 + $0xd8] sm:$0xff]
      %v177 = vld [vmem:[%s130 + $0xe0] sm:$0xff]
      %v178 = vld [vmem:[%s130 + $0xe8] sm:$0xff]
      %v179 = vld [vmem:[%s130 + $0xf0] sm:$0xff]
      %v180 = vld [vmem:[%s130 + $0xf8] sm:$0xff]
      %v181 = vld [vmem:[%s137] sm:$0xff]
      %v182 = vld [vmem:[%s137 + $0x8] sm:$0xff]
      %v183 = vld [vmem:[%s137 + $0x10] sm:$0xff]
      %v184 = vld [vmem:[%s137 + $0x18] sm:$0xff]
      %v185 = vld [vmem:[%s137 + $0x20] sm:$0xf]
      %186 = vxpose.xlu0.b32.start [1/16] %v149, 128
      %187 = vxpose.xlu0.b32.cont [2/16] %v150, 128
      %188 = vxpose.xlu0.b32.cont [3/16] %v151, 128
      %189 = vxpose.xlu0.b32.cont [4/16] %v152, 128
      %190 = vxpose.xlu0.b32.cont [5/16] %v153, 128
      %191 = vxpose.xlu0.b32.cont [6/16] %v154, 128
      %192 = vxpose.xlu0.b32.cont [7/16] %v155, 128
      %193 = vxpose.xlu0.b32.cont [8/16] %v156, 128
      %194 = vxpose.xlu0.b32.cont [9/16] %v157, 128
      %195 = vxpose.xlu0.b32.cont [10/16] %v158, 128
      %196 = vxpose.xlu0.b32.cont [11/16] %v159, 128
      %197 = vxpose.xlu0.b32.cont [12/16] %v160, 128
      %198 = vxpose.xlu0.b32.cont [13/16] %v161, 128
      %199 = vxpose.xlu0.b32.cont [14/16] %v162, 128
      %200 = vxpose.xlu0.b32.cont [15/16] %v163, 128
      %201 = vxpose.xlu0.b32.end [16/16] %v164, 128
      %v202 = vpop.trf.xlu0
      %v203 = vpop.trf.xlu0
      %v204 = vpop.trf.xlu0
      %v205 = vpop.trf.xlu0
      %v206 = vpop.trf.xlu0
      %v207 = vpop.trf.xlu0
      %v208 = vpop.trf.xlu0
      %v209 = vpop.trf.xlu0
      %v210 = vpop.trf.xlu0
      %v211 = vpop.trf.xlu0
      %v212 = vpop.trf.xlu0
      %v213 = vpop.trf.xlu0
      %v214 = vpop.trf.xlu0
      %v215 = vpop.trf.xlu0
      %v216 = vpop.trf.xlu0
      %v217 = vpop.trf.xlu0
      %218 = vxpose.xlu0.b32.start [1/16] %v165, 128
      %219 = vxpose.xlu0.b32.cont [2/16] %v166, 128
      %220 = vxpose.xlu0.b32.cont [3/16] %v167, 128
      %221 = vxpose.xlu0.b32.cont [4/16] %v168, 128
      %222 = vxpose.xlu0.b32.cont [5/16] %v169, 128
      %223 = vxpose.xlu0.b32.cont [6/16] %v170, 128
      %224 = vxpose.xlu0.b32.cont [7/16] %v171, 128
      %225 = vxpose.xlu0.b32.cont [8/16] %v172, 128
      %226 = vxpose.xlu0.b32.cont [9/16] %v173, 128
      %227 = vxpose.xlu0.b32.cont [10/16] %v174, 128
      %228 = vxpose.xlu0.b32.cont [11/16] %v175, 128
      %229 = vxpose.xlu0.b32.cont [12/16] %v176, 128
      %230 = vxpose.xlu0.b32.cont [13/16] %v177, 128
      %231 = vxpose.xlu0.b32.cont [14/16] %v178, 128
      %232 = vxpose.xlu0.b32.cont [15/16] %v179, 128
      %233 = vxpose.xlu0.b32.end [16/16] %v180, 128
      %v234 = vpop.trf.xlu0
      %v235 = vpop.trf.xlu0
      %v236 = vpop.trf.xlu0
      %v237 = vpop.trf.xlu0
      %v238 = vpop.trf.xlu0
      %v239 = vpop.trf.xlu0
      %v240 = vpop.trf.xlu0
      %v241 = vpop.trf.xlu0
      %v242 = vpop.trf.xlu0
      %v243 = vpop.trf.xlu0
      %v244 = vpop.trf.xlu0
      %v245 = vpop.trf.xlu0
      %v246 = vpop.trf.xlu0
      %v247 = vpop.trf.xlu0
      %v248 = vpop.trf.xlu0
      %v249 = vpop.trf.xlu0
      %250 = vmatprep.subr.mxu0 0.0
      %251 = vmatpush1.msra.mxu0 %v149
      %252 = vmatprep.subr.mxu0 0.0
      %253 = vmatpush1.msra.mxu0 %v150
      %254 = vmatprep.subr.mxu0 0.0
      %255 = vmatpush1.msra.mxu0 %v151
      %256 = vmatprep.subr.mxu0 0.0
      %257 = vmatpush1.msra.mxu0 %v152
      %258 = vmatprep.subr.mxu0 0.0
      %259 = vmatpush1.msra.mxu0 %v153
      %260 = vmatprep.subr.mxu0 0.0
      %261 = vmatpush1.msra.mxu0 %v154
      %262 = vmatprep.subr.mxu0 0.0
      %263 = vmatpush1.msra.mxu0 %v155
      %264 = vmatprep.subr.mxu0 0.0
      %265 = vmatpush1.msra.mxu0 %v156
      %266 = vmatprep.subr.mxu0 0.0
      %267 = vmatpush1.msra.mxu0 %v157
      %268 = vmatprep.subr.mxu0 0.0
      %269 = vmatpush1.msra.mxu0 %v158
      %270 = vmatprep.subr.mxu0 0.0
      %271 = vmatpush1.msra.mxu0 %v159
      %272 = vmatprep.subr.mxu0 0.0
      %273 = vmatpush1.msra.mxu0 %v160
      %274 = vmatprep.subr.mxu0 0.0
      %275 = vmatpush1.msra.mxu0 %v161
      %276 = vmatprep.subr.mxu0 0.0
      %277 = vmatpush1.msra.mxu0 %v162
      %278 = vmatprep.subr.mxu0 0.0
      %279 = vmatpush1.msra.mxu0 %v163
      %280 = vmatprep.subr.mxu0 0.0
      %281 = vmatpush1.msra.mxu0 %v164
      %282 = vmatprep.subr.mxu0 0.0
      %283 = vmatpush1.msra.mxu0 %v165
      %284 = vmatprep.subr.mxu0 0.0
      %285 = vmatpush1.msra.mxu0 %v166
      %286 = vmatprep.subr.mxu0 0.0
      %287 = vmatpush1.msra.mxu0 %v167
      %288 = vmatprep.subr.mxu0 0.0
      %289 = vmatpush1.msra.mxu0 %v168
      %290 = vmatprep.subr.mxu0 0.0
      %291 = vmatpush1.msra.mxu0 %v169
      %292 = vmatprep.subr.mxu0 0.0
      %293 = vmatpush1.msra.mxu0 %v170
      %294 = vmatprep.subr.mxu0 0.0
      %295 = vmatpush1.msra.mxu0 %v171
      %296 = vmatprep.subr.mxu0 0.0
      %297 = vmatpush1.msra.mxu0 %v172
      %298 = vmatprep.subr.mxu0 0.0
      %299 = vmatpush1.msra.mxu0 %v173
      %300 = vmatprep.subr.mxu0 0.0
      %301 = vmatpush1.msra.mxu0 %v174
      %302 = vmatprep.subr.mxu0 0.0
      %303 = vmatpush1.msra.mxu0 %v175
      %304 = vmatprep.subr.mxu0 0.0
      %305 = vmatpush1.msra.mxu0 %v176
      %306 = vmatprep.subr.mxu0 0.0
      %307 = vmatpush1.msra.mxu0 %v177
      %308 = vmatprep.subr.mxu0 0.0
      %309 = vmatpush1.msra.mxu0 %v178
      %310 = vmatprep.subr.mxu0 0.0
      %311 = vmatpush1.msra.mxu0 %v179
      %312 = vmatprep.subr.mxu0 0.0
      %313 = vmatpush1.msra.mxu0 %v180
      %314 = vmatprep.mubr.f32.mxu0 %v234
      %315 = vmatmul.mubr.f32.gmra.mrb[0].mxu0 %v202
      %v316 = vpop.f32.mrb[0].mxu0
      %v317 = vadd.f32 0.0, %v316
      %v318 = vpop.f32.mrb[0].mxu0
      %319 = vmatprep.mubr.f32.mxu0 %v235
      %320 = vmatmul.mubr.f32.gmra.mrb[0].mxu0 %v203
      %v321 = vpop.f32.mrb[0].mxu0
      %v322 = vadd.f32 0.0, %v321
      %v323 = vpop.f32.mrb[0].mxu0
      %324 = vmatprep.mubr.f32.mxu0 %v236
      %325 = vmatmul.mubr.f32.gmra.mrb[0].mxu0 %v204
      %v326 = vpop.f32.mrb[0].mxu0
      %v327 = vadd.f32 0.0, %v326
      %v328 = vpop.f32.mrb[0].mxu0
      %329 = vmatprep.mubr.f32.mxu0 %v237
      %330 = vmatmul.mubr.f32.gmra.mrb[0].mxu0 %v205
      %v331 = vpop.f32.mrb[0].mxu0
      %v332 = vadd.f32 0.0, %v331
      %v333 = vpop.f32.mrb[0].mxu0
      %334 = vmatprep.mubr.f32.mxu0 %v238
      %335 = vmatmul.mubr.f32.gmra.mrb[0].mxu0 %v206
      %v336 = vpop.f32.mrb[0].mxu0
      %v337 = vadd.f32 0.0, %v336
      %v338 = vpop.f32.mrb[0].mxu0
      %339 = vdwg.mxu0
      %v340 = vadd.f32 %v181, %v317
      %v341 = vadd.f32 %v182, %v322
      %v342 = vadd.f32 %v183, %v327
      %v343 = vadd.f32 %v184, %v332
      %v344 = vadd.f32 %v185, %v337
      %vm345 = vcmask 293888
      %346 = vst.msk [vmem:[%s137] sm:$0xff] %vm345, %v340
      %347 = vst.msk [vmem:[%s137 + $0x8] sm:$0xff] %vm345, %v341
      %348 = vst.msk [vmem:[%s137 + $0x10] sm:$0xff] %vm345, %v342
      %349 = vst.msk [vmem:[%s137 + $0x18] sm:$0xff] %vm345, %v343
      %vm350 = vcmask 289792
      %351 = vst.msk [vmem:[%s137 + $0x20] sm:$0xf] %vm350, %v344
      %p352 = scmp.lt.s32.totalorder %s16, 1
      %s353 = scalar_select %p352, %s16, 1
      %s354 = smul.addr %s353, 5
      %s355 = smul.addr %s354, 8
      %s356 = scalar_lea.vmem %s1, %s355
      // Predicated region
      $region29: #{tpu_custom_call.1} parent=23 // pred_check
        %p357 = pneg %p70
      $region30: #{tpu_custom_call.1} parent=23 // pred_check_branch
        %359 = sbr.rel (%p357) target = $region32
      $region31: #{tpu_custom_call.1} parent=23 // pred_region
        _
      $region32: #{tpu_custom_call.1} parent=23 // pred_fallthru
        _
    $region24: #{tpu_custom_call.1} parent=5 // pred_fallthru
      _
    %p360 = scmp.le.s32.totalorder 2, %s7
    // Predicated region
    $region33: #{tpu_custom_call.1} parent=5 // pred_check
      %p361 = pneg %p360
    $region34: #{tpu_custom_call.1} parent=5 // pred_check_branch
      %363 = sbr.rel (%p361) target = $region36
    $region35: #{tpu_custom_call.1} parent=5 // pred_region
      %s364 = ssub.s32 %s7, 2
      // Predicated region
      $region37: #{tpu_custom_call.1} parent=35 // pred_check
        %p365 = pneg %p76
      $region38: #{tpu_custom_call.1} parent=35 // pred_check_branch
        %367 = sbr.rel (%p365) target = $region40
      $region39: #{tpu_custom_call.1} parent=35 // pred_region
        %p368 = scmp.lt.s32.totalorder %s18, 1
        %s369 = scalar_select %p368, %s18, 1
        %s370 = smul.addr %s369, 5
        %s371 = smul.addr %s370, 8
        %s372 = scalar_lea.vmem %s1, %s371
      $region40: #{tpu_custom_call.1} parent=35 // pred_fallthru
        _
    $region36: #{tpu_custom_call.1} parent=5 // pred_fallthru
      _
  $region6: #{tpu_custom_call.1} parent=0 // loop_footer
    %s11 = sadd.s32 1, %s7
  $region7: #{tpu_custom_call.1} parent=0 // loop_footer_branch
    %6 = sbr.rel target = $region3
  $region8: #{tpu_custom_call.1} parent=0 // loop_exit
    _

</llo_original>
